<compile_context>
chip_gen: v7x
topology: tpu7x:2x2x1
jax: 0.10.0
libtpu: 0.0.40
codegen_flags: <defaults>
</compile_context>

<pallas_src>
import jax
import jax.numpy as jnp
from jax.experimental import pallas as pl
from jax.experimental.pallas import tpu as pltpu

INPUT_SIZE = 21
HIDDEN_SIZE = 3
OUTPUT_SIZE = 1

# dot_general dimension numbers for A @ B^T (contract last dim of both).
_NT_DIMS = (((1,), (1,)), ((), ()))

# Row layout of the packed parameter array (shape (_P_ROWS, 2H), f32).
# Matrix blocks start on 8-row (sublane) boundaries.
_ROW_W_IH_RZ = 0     # rows [0, 21)  cols [0, 2H) : weight_ih_l0[:2H].T
_ROW_W_IH_N = 24     # rows [24, 45) cols [0,  H) : weight_ih_l0[2H:].T
_ROW_W_HH_RZ = 48    # rows [48, 51) cols [0, 2H) : weight_hh_l0[:2H].T
_ROW_W_HH_N = 56     # rows [56, 59) cols [0,  H) : weight_hh_l0[2H:].T
_ROW_B_IH_RZ = 64    # cols [0, 2H)
_ROW_B_IH_N = 65     # cols [0,  H)
_ROW_B_HH_RZ = 66    # cols [0, 2H)
_ROW_B_HH_N = 67     # cols [0,  H)
_ROW_HEAD = 68       # cols [0, H) = linear weight, col H = linear bias
_P_ROWS = 72


def gru_kernel(x_ref, h0_ref, p_ref, out_ref, h_scratch):
    """Single-program kernel: whole sequence resident in VMEM.

    x_ref     : (T, I)         float32  time-major inputs
    h0_ref    : (1, H)         float32  initial hidden state
    p_ref     : (_P_ROWS, 2H)  float32  packed, pre-transposed, per-gate params
    out_ref   : (1, T_pad)     float32  lane-dense per-timestep head outputs
    h_scratch : (T_pad, H)     float32  VMEM scratch holding every hidden state
    """
    T = x_ref.shape[0]
    H = HIDDEN_SIZE
    H2 = 2 * HIDDEN_SIZE

    # ---- one-time setup, all off the recurrence critical path ----
    x = x_ref[...]                                                   # (T, I)

    # Non-recurrent input projections for all timesteps at once (2 MXU ops),
    # with the input biases folded in.  Each gate group lands in lanes
    # [0, width) so the per-step row slices need no lane relayout.
    gi_rz = jnp.dot(x, p_ref[_ROW_W_IH_RZ:_ROW_W_IH_RZ + INPUT_SIZE, 0:H2],
                    preferred_element_type=jnp.float32) \
        + p_ref[_ROW_B_IH_RZ:_ROW_B_IH_RZ + 1, 0:H2]                 # (T, 2H)
    gi_n = jnp.dot(x, p_ref[_ROW_W_IH_N:_ROW_W_IH_N + INPUT_SIZE, 0:H],
                   preferred_element_type=jnp.float32) \
        + p_ref[_ROW_B_IH_N:_ROW_B_IH_N + 1, 0:H]                    # (T, H)

    # Loop-invariant recurrent weights/biases, hoisted out of the recurrence.
    b_hh_rz = p_ref[_ROW_B_HH_RZ:_ROW_B_HH_RZ + 1, 0:H2]             # (1, 2H)
    b_hh_n = p_ref[_ROW_B_HH_N:_ROW_B_HH_N + 1, 0:H]                 # (1, H)
    w_hh_rz_rows = [p_ref[_ROW_W_HH_RZ + k:_ROW_W_HH_RZ + k + 1, 0:H2]
                    for k in range(H)]                               # H x (1, 2H)
    w_hh_n_rows = [p_ref[_ROW_W_HH_N + k:_ROW_W_HH_N + k + 1, 0:H]
                   for k in range(H)]                                # H x (1, H)

    h = h0_ref[...]                                                  # (1, H)

    # ---- statically unrolled recurrence (T is small & static) ----
    # Only VPU FMAs + 2 EUP transcendentals (+ overlapped XLU splats/shift)
    # remain on the serial dependency chain per step.
    for t in range(T):
        gi_rz_t = gi_rz[t:t + 1, :]                                  # (1, 2H)
        gi_n_t = gi_n[t:t + 1, :]                                    # (1, H)

        # h-component splats: issued first; mutually independent, so their
        # XLU FIFO latencies overlap.
        hk = [h[:, k:k + 1] for k in range(H)]                       # H x (1, 1)

        # Recurrent projections on the VPU, per gate group, each accumulated
        # directly in lanes [0, width) -- no live-vreg slicing afterwards.
        gh_rz = b_hh_rz
        gh_n = b_hh_n
        for k in range(H):
            gh_rz = gh_rz + hk[k] * w_hh_rz_rows[k]                  # (1,1)*(1,2H)
            gh_n = gh_n + hk[k] * w_hh_n_rows[k]                     # (1,1)*(1, H)

        # Single fused EUP push for the r and z sigmoids.
        rz = jax.nn.sigmoid(gi_rz_t + gh_rz)                         # (1, 2H)
        r = rz[:, 0:H]                                               # low lanes
        n = jnp.tanh(gi_n_t + r * gh_n)                              # (1, H)
        z = rz[:, H:H2]                                              # shift hides under tanh
        h = n + z * (h - n)                                          # (1, H)

        h_scratch[pl.ds(t, 1), :] = h                                # static row store

    # ---- hoisted head: one Linear(H->1) + Sigmoid over all timesteps ----
    # Padded rows [T:T_pad] of h_scratch are uninitialized; their head lanes
    # are discarded by the wrapper and cannot leak into the used lanes.
    hs = h_scratch[...]                                              # (T_pad, H)
    w_lin = p_ref[_ROW_HEAD:_ROW_HEAD + 1, 0:H]                      # (1, H)
    b_lin = p_ref[_ROW_HEAD:_ROW_HEAD + 1, H:H + 1]                  # (1, 1)
    head = jax.lax.dot_general(w_lin, hs, _NT_DIMS,
                               preferred_element_type=jnp.float32)   # (1, T_pad)
    out_ref[...] = jax.nn.sigmoid(head + b_lin)                      # lane-dense store


def pack_gru_params(params):
    """One-time parameter prep: transpose, split per-gate, pack into one array.

    params = (w_ih (3H,I), w_hh (3H,H), b_ih (3H,), b_hh (3H,),
              w_lin (1,H), b_lin (1,))
    returns a single (_P_ROWS, 2H) float32 array.
    """
    w_ih, w_hh, b_ih, b_hh, w_lin, b_lin = params
    H = HIDDEN_SIZE
    w_ih_t = jnp.asarray(w_ih, jnp.float32).T                        # (I, 3H)
    w_hh_t = jnp.asarray(w_hh, jnp.float32).T                        # (H, 3H)
    b_ih = jnp.asarray(b_ih, jnp.float32)
    b_hh = jnp.asarray(b_hh, jnp.float32)
    w_lin = jnp.asarray(w_lin, jnp.float32).reshape(-1)
    b_lin = jnp.asarray(b_lin, jnp.float32).reshape(-1)

    p = jnp.zeros((_P_ROWS, 2 * H), jnp.float32)
    p = p.at[_ROW_W_IH_RZ:_ROW_W_IH_RZ + INPUT_SIZE, 0:2 * H].set(w_ih_t[:, 0:2 * H])
    p = p.at[_ROW_W_IH_N:_ROW_W_IH_N + INPUT_SIZE, 0:H].set(w_ih_t[:, 2 * H:3 * H])
    p = p.at[_ROW_W_HH_RZ:_ROW_W_HH_RZ + H, 0:2 * H].set(w_hh_t[:, 0:2 * H])
    p = p.at[_ROW_W_HH_N:_ROW_W_HH_N + H, 0:H].set(w_hh_t[:, 2 * H:3 * H])
    p = p.at[_ROW_B_IH_RZ, 0:2 * H].set(b_ih[0:2 * H])
    p = p.at[_ROW_B_IH_N, 0:H].set(b_ih[2 * H:3 * H])
    p = p.at[_ROW_B_HH_RZ, 0:2 * H].set(b_hh[0:2 * H])
    p = p.at[_ROW_B_HH_N, 0:H].set(b_hh[2 * H:3 * H])
    p = p.at[_ROW_HEAD, 0:H].set(w_lin)
    p = p.at[_ROW_HEAD, H].set(b_lin[0])
    return p


def gru_forward(x, hidden, packed_params):
    """Mirrors GRU.forward.

    x             : (1, T, INPUT_SIZE)  batch-first with batch=1
    hidden        : (1, 1, HIDDEN_SIZE) initHidden()
    packed_params : output of pack_gru_params (prepared once, reused per call)
    returns       : (T, OUTPUT_SIZE)
    """
    T = x.shape[1]
    T_pad = pl.cdiv(T, 128) * 128  # lane-dense output row, padded to 128 lanes

    # transpose(0,1) + view(-1, 1, 21) with batch=1 is just the (T, 21) slab.
    x2d = jnp.transpose(x, (1, 0, 2)).reshape(T, INPUT_SIZE).astype(jnp.float32)
    h0 = hidden.reshape(1, HIDDEN_SIZE).astype(jnp.float32)

    vmem = pl.BlockSpec(memory_space=pltpu.MemorySpace.VMEM)

    # Whole-sequence-in-VMEM single-program kernel; total footprint is a few
    # KB, far below the scoped VMEM limit on every TPU generation.
    out_padded = pl.pallas_call(
        gru_kernel,
        out_shape=jax.ShapeDtypeStruct((1, T_pad), jnp.float32),
        in_specs=[vmem, vmem, vmem],
        out_specs=vmem,
        scratch_shapes=[pltpu.VMEM((T_pad, HIDDEN_SIZE), jnp.float32)],
    )(x2d, h0, packed_params)

    # (1, T_pad) lane-dense slab -> (T, 1), matching the PyTorch output.
    return out_padded[0, :T].reshape(T, OUTPUT_SIZE)


def init_params(key):
    """Deterministic init matching PyTorch shapes (uniform(-1/sqrt(H), 1/sqrt(H)))."""
    k = 1.0 / jnp.sqrt(jnp.float32(HIDDEN_SIZE))
    ks = jax.random.split(key, 6)
    w_ih = jax.random.uniform(ks[0], (3 * HIDDEN_SIZE, INPUT_SIZE), jnp.float32, -k, k)
    w_hh = jax.random.uniform(ks[1], (3 * HIDDEN_SIZE, HIDDEN_SIZE), jnp.float32, -k, k)
    b_ih = jax.random.uniform(ks[2], (3 * HIDDEN_SIZE,), jnp.float32, -k, k)
    b_hh = jax.random.uniform(ks[3], (3 * HIDDEN_SIZE,), jnp.float32, -k, k)
    w_lin = jax.random.uniform(ks[4], (OUTPUT_SIZE, HIDDEN_SIZE), jnp.float32, -k, k)
    b_lin = jax.random.uniform(ks[5], (OUTPUT_SIZE,), jnp.float32, -k, k)
    return w_ih, w_hh, b_ih, b_hh, w_lin, b_lin


def gru_forward_ref(x, hidden, params):
    """Pure-JAX reference of the same forward pass (for verification)."""
    w_ih, w_hh, b_ih, b_hh, w_lin, b_lin = params
    T = x.shape[1]
    x2d = jnp.transpose(x, (1, 0, 2)).reshape(T, INPUT_SIZE)
    h = hidden.reshape(1, HIDDEN_SIZE)
    H = HIDDEN_SIZE
    outs = []
    for t in range(T):
        gi = x2d[t:t + 1] @ w_ih.T + b_ih
        gh = h @ w_hh.T + b_hh
        r = jax.nn.sigmoid(gi[:, 0:H] + gh[:, 0:H])
        z = jax.nn.sigmoid(gi[:, H:2 * H] + gh[:, H:2 * H])
        n = jnp.tanh(gi[:, 2 * H:3 * H] + r * gh[:, 2 * H:3 * H])
        h = (1.0 - z) * n + z * h
        outs.append(jax.nn.sigmoid(h @ w_lin.T + b_lin))
    return jnp.concatenate(outs, axis=0)


if __name__ == "__main__":
    key = jax.random.PRNGKey(0)
    k_param, k_x = jax.random.split(key)

    T = 8  # sequence length
    params = init_params(k_param)
    x = jax.random.normal(k_x, (1, T, INPUT_SIZE), jnp.float32)   # batch-first, batch=1
    hidden = jnp.zeros((1, 1, HIDDEN_SIZE), jnp.float32)          # initHidden()

    packed = pack_gru_params(params)                              # one-time param prep

    gru_fwd = jax.jit(gru_forward)
    out = gru_fwd(x, hidden, packed)
    out = jax.block_until_ready(out)

    ref = gru_forward_ref(x, hidden, params)
    assert out.shape == (T, OUTPUT_SIZE)
    assert jnp.allclose(out, ref, atol=1e-4, rtol=1e-4), (out, ref)

    print("KERNEL_OK")
</pallas_src>

<mosaic_0001>
module attributes {stable_mosaic.version = 11 : i64} {
  func.func @gru_kernel(%arg0: memref<8x21xf32, #tpu.memory_space<vmem>>, %arg1: memref<1x3xf32, #tpu.memory_space<vmem>>, %arg2: memref<72x6xf32, #tpu.memory_space<vmem>>, %arg3: memref<1x128xf32, #tpu.memory_space<vmem>>, %arg4: memref<128x3xf32, #tpu.memory_space<vmem>>) attributes {dimension_semantics = [], scalar_prefetch = 0 : i64, scratch_operands = 1 : i64, tpu.core_type = #tpu.core_type<tc>} {
    %c0 = arith.constant 0 : index
    %c0_0 = arith.constant 0 : index
    %0 = vector.load %arg0[%c0, %c0_0] : memref<8x21xf32, #tpu.memory_space<vmem>>, vector<8x21xf32>
    %c0_1 = arith.constant 0 : index
    %c0_2 = arith.constant 0 : index
    %1 = vector.load %arg2[%c0_1, %c0_2] : memref<72x6xf32, #tpu.memory_space<vmem>>, vector<21x6xf32>
    %cst = arith.constant dense<0.000000e+00> : vector<8x6xf32>
    %2 = tpu.matmul %0, %1, %cst {dimension_numbers = #tpu.dot_dimension_numbers<[1], [0], [0], [1], [0, 0, 1, 1], [], []>} : vector<8x21xf32>, vector<21x6xf32>, vector<8x6xf32> -> vector<8x6xf32>
    %c64 = arith.constant 64 : index
    %c0_3 = arith.constant 0 : index
    %3 = vector.load %arg2[%c64, %c0_3] : memref<72x6xf32, #tpu.memory_space<vmem>>, vector<1x6xf32>
    %4 = vector.broadcast %3 : vector<1x6xf32> to vector<8x6xf32>
    %5 = arith.addf %2, %4 : vector<8x6xf32>
    %c24 = arith.constant 24 : index
    %c0_4 = arith.constant 0 : index
    %6 = vector.load %arg2[%c24, %c0_4] : memref<72x6xf32, #tpu.memory_space<vmem>>, vector<21x3xf32>
    %cst_5 = arith.constant dense<0.000000e+00> : vector<8x3xf32>
    %7 = tpu.matmul %0, %6, %cst_5 {dimension_numbers = #tpu.dot_dimension_numbers<[1], [0], [0], [1], [0, 0, 1, 1], [], []>} : vector<8x21xf32>, vector<21x3xf32>, vector<8x3xf32> -> vector<8x3xf32>
    %c65 = arith.constant 65 : index
    %c0_6 = arith.constant 0 : index
    %8 = vector.load %arg2[%c65, %c0_6] : memref<72x6xf32, #tpu.memory_space<vmem>>, vector<1x3xf32>
    %9 = vector.broadcast %8 : vector<1x3xf32> to vector<8x3xf32>
    %10 = arith.addf %7, %9 : vector<8x3xf32>
    %c66 = arith.constant 66 : index
    %c0_7 = arith.constant 0 : index
    %11 = vector.load %arg2[%c66, %c0_7] : memref<72x6xf32, #tpu.memory_space<vmem>>, vector<1x6xf32>
    %c67 = arith.constant 67 : index
    %c0_8 = arith.constant 0 : index
    %12 = vector.load %arg2[%c67, %c0_8] : memref<72x6xf32, #tpu.memory_space<vmem>>, vector<1x3xf32>
    %c48 = arith.constant 48 : index
    %c0_9 = arith.constant 0 : index
    %13 = vector.load %arg2[%c48, %c0_9] : memref<72x6xf32, #tpu.memory_space<vmem>>, vector<1x6xf32>
    %c49 = arith.constant 49 : index
    %c0_10 = arith.constant 0 : index
    %14 = vector.load %arg2[%c49, %c0_10] : memref<72x6xf32, #tpu.memory_space<vmem>>, vector<1x6xf32>
    %c50 = arith.constant 50 : index
    %c0_11 = arith.constant 0 : index
    %15 = vector.load %arg2[%c50, %c0_11] : memref<72x6xf32, #tpu.memory_space<vmem>>, vector<1x6xf32>
    %c56 = arith.constant 56 : index
    %c0_12 = arith.constant 0 : index
    %16 = vector.load %arg2[%c56, %c0_12] : memref<72x6xf32, #tpu.memory_space<vmem>>, vector<1x3xf32>
    %c57 = arith.constant 57 : index
    %c0_13 = arith.constant 0 : index
    %17 = vector.load %arg2[%c57, %c0_13] : memref<72x6xf32, #tpu.memory_space<vmem>>, vector<1x3xf32>
    %c58 = arith.constant 58 : index
    %c0_14 = arith.constant 0 : index
    %18 = vector.load %arg2[%c58, %c0_14] : memref<72x6xf32, #tpu.memory_space<vmem>>, vector<1x3xf32>
    %c0_15 = arith.constant 0 : index
    %c0_16 = arith.constant 0 : index
    %19 = vector.load %arg1[%c0_15, %c0_16] : memref<1x3xf32, #tpu.memory_space<vmem>>, vector<1x3xf32>
    %20 = vector.extract_strided_slice %5 {offsets = [0, 0], sizes = [1, 6], strides = [1, 1]} : vector<8x6xf32> to vector<1x6xf32>
    %21 = vector.extract_strided_slice %10 {offsets = [0, 0], sizes = [1, 3], strides = [1, 1]} : vector<8x3xf32> to vector<1x3xf32>
    %22 = vector.extract_strided_slice %19 {offsets = [0, 0], sizes = [1, 1], strides = [1, 1]} : vector<1x3xf32> to vector<1x1xf32>
    %23 = vector.extract_strided_slice %19 {offsets = [0, 1], sizes = [1, 1], strides = [1, 1]} : vector<1x3xf32> to vector<1x1xf32>
    %24 = vector.extract_strided_slice %19 {offsets = [0, 2], sizes = [1, 1], strides = [1, 1]} : vector<1x3xf32> to vector<1x1xf32>
    %25 = vector.broadcast %22 : vector<1x1xf32> to vector<1x6xf32>
    %26 = arith.mulf %25, %13 : vector<1x6xf32>
    %27 = arith.addf %11, %26 : vector<1x6xf32>
    %28 = vector.broadcast %22 : vector<1x1xf32> to vector<1x3xf32>
    %29 = arith.mulf %28, %16 : vector<1x3xf32>
    %30 = arith.addf %12, %29 : vector<1x3xf32>
    %31 = vector.broadcast %23 : vector<1x1xf32> to vector<1x6xf32>
    %32 = arith.mulf %31, %14 : vector<1x6xf32>
    %33 = arith.addf %27, %32 : vector<1x6xf32>
    %34 = vector.broadcast %23 : vector<1x1xf32> to vector<1x3xf32>
    %35 = arith.mulf %34, %17 : vector<1x3xf32>
    %36 = arith.addf %30, %35 : vector<1x3xf32>
    %37 = vector.broadcast %24 : vector<1x1xf32> to vector<1x6xf32>
    %38 = arith.mulf %37, %15 : vector<1x6xf32>
    %39 = arith.addf %33, %38 : vector<1x6xf32>
    %40 = vector.broadcast %24 : vector<1x1xf32> to vector<1x3xf32>
    %41 = arith.mulf %40, %18 : vector<1x3xf32>
    %42 = arith.addf %36, %41 : vector<1x3xf32>
    %43 = arith.addf %20, %39 : vector<1x6xf32>
    %44 = arith.negf %43 : vector<1x6xf32>
    %45 = math.exp %44 : vector<1x6xf32>
    %cst_17 = arith.constant 1.000000e+00 : f32
    %46 = vector.broadcast %cst_17 : f32 to vector<1x6xf32>
    %47 = arith.addf %46, %45 : vector<1x6xf32>
    %48 = arith.divf %46, %47 : vector<1x6xf32>
    %49 = vector.extract_strided_slice %48 {offsets = [0, 0], sizes = [1, 3], strides = [1, 1]} : vector<1x6xf32> to vector<1x3xf32>
    %50 = arith.mulf %49, %42 : vector<1x3xf32>
    %51 = arith.addf %21, %50 : vector<1x3xf32>
    %52 = math.tanh %51 : vector<1x3xf32>
    %53 = vector.extract_strided_slice %48 {offsets = [0, 3], sizes = [1, 3], strides = [1, 1]} : vector<1x6xf32> to vector<1x3xf32>
    %54 = arith.subf %19, %52 : vector<1x3xf32>
    %55 = arith.mulf %53, %54 : vector<1x3xf32>
    %56 = arith.addf %52, %55 : vector<1x3xf32>
    %c0_18 = arith.constant 0 : index
    %c0_19 = arith.constant 0 : index
    %57 = vector.load %arg4[%c0_18, %c0_19] : memref<128x3xf32, #tpu.memory_space<vmem>>, vector<1x3xf32>
    tpu.vector_store %arg4[%c0_18, %c0_19], %56 {strides = array<i32>} : memref<128x3xf32, #tpu.memory_space<vmem>>, vector<1x3xf32>,
    %58 = vector.extract_strided_slice %5 {offsets = [1, 0], sizes = [1, 6], strides = [1, 1]} : vector<8x6xf32> to vector<1x6xf32>
    %59 = vector.extract_strided_slice %10 {offsets = [1, 0], sizes = [1, 3], strides = [1, 1]} : vector<8x3xf32> to vector<1x3xf32>
    %60 = vector.extract_strided_slice %56 {offsets = [0, 0], sizes = [1, 1], strides = [1, 1]} : vector<1x3xf32> to vector<1x1xf32>
    %61 = vector.extract_strided_slice %56 {offsets = [0, 1], sizes = [1, 1], strides = [1, 1]} : vector<1x3xf32> to vector<1x1xf32>
    %62 = vector.extract_strided_slice %56 {offsets = [0, 2], sizes = [1, 1], strides = [1, 1]} : vector<1x3xf32> to vector<1x1xf32>
    %63 = vector.broadcast %60 : vector<1x1xf32> to vector<1x6xf32>
    %64 = arith.mulf %63, %13 : vector<1x6xf32>
    %65 = arith.addf %11, %64 : vector<1x6xf32>
    %66 = vector.broadcast %60 : vector<1x1xf32> to vector<1x3xf32>
    %67 = arith.mulf %66, %16 : vector<1x3xf32>
    %68 = arith.addf %12, %67 : vector<1x3xf32>
    %69 = vector.broadcast %61 : vector<1x1xf32> to vector<1x6xf32>
    %70 = arith.mulf %69, %14 : vector<1x6xf32>
    %71 = arith.addf %65, %70 : vector<1x6xf32>
    %72 = vector.broadcast %61 : vector<1x1xf32> to vector<1x3xf32>
    %73 = arith.mulf %72, %17 : vector<1x3xf32>
    %74 = arith.addf %68, %73 : vector<1x3xf32>
    %75 = vector.broadcast %62 : vector<1x1xf32> to vector<1x6xf32>
    %76 = arith.mulf %75, %15 : vector<1x6xf32>
    %77 = arith.addf %71, %76 : vector<1x6xf32>
    %78 = vector.broadcast %62 : vector<1x1xf32> to vector<1x3xf32>
    %79 = arith.mulf %78, %18 : vector<1x3xf32>
    %80 = arith.addf %74, %79 : vector<1x3xf32>
    %81 = arith.addf %58, %77 : vector<1x6xf32>
    %82 = arith.negf %81 : vector<1x6xf32>
    %83 = math.exp %82 : vector<1x6xf32>
    %cst_20 = arith.constant 1.000000e+00 : f32
    %84 = vector.broadcast %cst_20 : f32 to vector<1x6xf32>
    %85 = arith.addf %84, %83 : vector<1x6xf32>
    %86 = arith.divf %84, %85 : vector<1x6xf32>
    %87 = vector.extract_strided_slice %86 {offsets = [0, 0], sizes = [1, 3], strides = [1, 1]} : vector<1x6xf32> to vector<1x3xf32>
    %88 = arith.mulf %87, %80 : vector<1x3xf32>
    %89 = arith.addf %59, %88 : vector<1x3xf32>
    %90 = math.tanh %89 : vector<1x3xf32>
    %91 = vector.extract_strided_slice %86 {offsets = [0, 3], sizes = [1, 3], strides = [1, 1]} : vector<1x6xf32> to vector<1x3xf32>
    %92 = arith.subf %56, %90 : vector<1x3xf32>
    %93 = arith.mulf %91, %92 : vector<1x3xf32>
    %94 = arith.addf %90, %93 : vector<1x3xf32>
    %c1 = arith.constant 1 : index
    %c0_21 = arith.constant 0 : index
    %95 = vector.load %arg4[%c1, %c0_21] : memref<128x3xf32, #tpu.memory_space<vmem>>, vector<1x3xf32>
    tpu.vector_store %arg4[%c1, %c0_21], %94 {strides = array<i32>} : memref<128x3xf32, #tpu.memory_space<vmem>>, vector<1x3xf32>,
    %96 = vector.extract_strided_slice %5 {offsets = [2, 0], sizes = [1, 6], strides = [1, 1]} : vector<8x6xf32> to vector<1x6xf32>
    %97 = vector.extract_strided_slice %10 {offsets = [2, 0], sizes = [1, 3], strides = [1, 1]} : vector<8x3xf32> to vector<1x3xf32>
    %98 = vector.extract_strided_slice %94 {offsets = [0, 0], sizes = [1, 1], strides = [1, 1]} : vector<1x3xf32> to vector<1x1xf32>
    %99 = vector.extract_strided_slice %94 {offsets = [0, 1], sizes = [1, 1], strides = [1, 1]} : vector<1x3xf32> to vector<1x1xf32>
    %100 = vector.extract_strided_slice %94 {offsets = [0, 2], sizes = [1, 1], strides = [1, 1]} : vector<1x3xf32> to vector<1x1xf32>
    %101 = vector.broadcast %98 : vector<1x1xf32> to vector<1x6xf32>
    %102 = arith.mulf %101, %13 : vector<1x6xf32>
    %103 = arith.addf %11, %102 : vector<1x6xf32>
    %104 = vector.broadcast %98 : vector<1x1xf32> to vector<1x3xf32>
    %105 = arith.mulf %104, %16 : vector<1x3xf32>
    %106 = arith.addf %12, %105 : vector<1x3xf32>
    %107 = vector.broadcast %99 : vector<1x1xf32> to vector<1x6xf32>
    %108 = arith.mulf %107, %14 : vector<1x6xf32>
    %109 = arith.addf %103, %108 : vector<1x6xf32>
    %110 = vector.broadcast %99 : vector<1x1xf32> to vector<1x3xf32>
    %111 = arith.mulf %110, %17 : vector<1x3xf32>
    %112 = arith.addf %106, %111 : vector<1x3xf32>
    %113 = vector.broadcast %100 : vector<1x1xf32> to vector<1x6xf32>
    %114 = arith.mulf %113, %15 : vector<1x6xf32>
    %115 = arith.addf %109, %114 : vector<1x6xf32>
    %116 = vector.broadcast %100 : vector<1x1xf32> to vector<1x3xf32>
    %117 = arith.mulf %116, %18 : vector<1x3xf32>
    %118 = arith.addf %112, %117 : vector<1x3xf32>
    %119 = arith.addf %96, %115 : vector<1x6xf32>
    %120 = arith.negf %119 : vector<1x6xf32>
    %121 = math.exp %120 : vector<1x6xf32>
    %cst_22 = arith.constant 1.000000e+00 : f32
    %122 = vector.broadcast %cst_22 : f32 to vector<1x6xf32>
    %123 = arith.addf %122, %121 : vector<1x6xf32>
    %124 = arith.divf %122, %123 : vector<1x6xf32>
    %125 = vector.extract_strided_slice %124 {offsets = [0, 0], sizes = [1, 3], strides = [1, 1]} : vector<1x6xf32> to vector<1x3xf32>
    %126 = arith.mulf %125, %118 : vector<1x3xf32>
    %127 = arith.addf %97, %126 : vector<1x3xf32>
    %128 = math.tanh %127 : vector<1x3xf32>
    %129 = vector.extract_strided_slice %124 {offsets = [0, 3], sizes = [1, 3], strides = [1, 1]} : vector<1x6xf32> to vector<1x3xf32>
    %130 = arith.subf %94, %128 : vector<1x3xf32>
    %131 = arith.mulf %129, %130 : vector<1x3xf32>
    %132 = arith.addf %128, %131 : vector<1x3xf32>
    %c2 = arith.constant 2 : index
    %c0_23 = arith.constant 0 : index
    %133 = vector.load %arg4[%c2, %c0_23] : memref<128x3xf32, #tpu.memory_space<vmem>>, vector<1x3xf32>
    tpu.vector_store %arg4[%c2, %c0_23], %132 {strides = array<i32>} : memref<128x3xf32, #tpu.memory_space<vmem>>, vector<1x3xf32>,
    %134 = vector.extract_strided_slice %5 {offsets = [3, 0], sizes = [1, 6], strides = [1, 1]} : vector<8x6xf32> to vector<1x6xf32>
    %135 = vector.extract_strided_slice %10 {offsets = [3, 0], sizes = [1, 3], strides = [1, 1]} : vector<8x3xf32> to vector<1x3xf32>
    %136 = vector.extract_strided_slice %132 {offsets = [0, 0], sizes = [1, 1], strides = [1, 1]} : vector<1x3xf32> to vector<1x1xf32>
    %137 = vector.extract_strided_slice %132 {offsets = [0, 1], sizes = [1, 1], strides = [1, 1]} : vector<1x3xf32> to vector<1x1xf32>
    %138 = vector.extract_strided_slice %132 {offsets = [0, 2], sizes = [1, 1], strides = [1, 1]} : vector<1x3xf32> to vector<1x1xf32>
    %139 = vector.broadcast %136 : vector<1x1xf32> to vector<1x6xf32>
    %140 = arith.mulf %139, %13 : vector<1x6xf32>
    %141 = arith.addf %11, %140 : vector<1x6xf32>
    %142 = vector.broadcast %136 : vector<1x1xf32> to vector<1x3xf32>
    %143 = arith.mulf %142, %16 : vector<1x3xf32>
    %144 = arith.addf %12, %143 : vector<1x3xf32>
    %145 = vector.broadcast %137 : vector<1x1xf32> to vector<1x6xf32>
    %146 = arith.mulf %145, %14 : vector<1x6xf32>
    %147 = arith.addf %141, %146 : vector<1x6xf32>
    %148 = vector.broadcast %137 : vector<1x1xf32> to vector<1x3xf32>
    %149 = arith.mulf %148, %17 : vector<1x3xf32>
    %150 = arith.addf %144, %149 : vector<1x3xf32>
    %151 = vector.broadcast %138 : vector<1x1xf32> to vector<1x6xf32>
    %152 = arith.mulf %151, %15 : vector<1x6xf32>
    %153 = arith.addf %147, %152 : vector<1x6xf32>
    %154 = vector.broadcast %138 : vector<1x1xf32> to vector<1x3xf32>
    %155 = arith.mulf %154, %18 : vector<1x3xf32>
    %156 = arith.addf %150, %155 : vector<1x3xf32>
    %157 = arith.addf %134, %153 : vector<1x6xf32>
    %158 = arith.negf %157 : vector<1x6xf32>
    %159 = math.exp %158 : vector<1x6xf32>
    %cst_24 = arith.constant 1.000000e+00 : f32
    %160 = vector.broadcast %cst_24 : f32 to vector<1x6xf32>
    %161 = arith.addf %160, %159 : vector<1x6xf32>
    %162 = arith.divf %160, %161 : vector<1x6xf32>
    %163 = vector.extract_strided_slice %162 {offsets = [0, 0], sizes = [1, 3], strides = [1, 1]} : vector<1x6xf32> to vector<1x3xf32>
    %164 = arith.mulf %163, %156 : vector<1x3xf32>
    %165 = arith.addf %135, %164 : vector<1x3xf32>
    %166 = math.tanh %165 : vector<1x3xf32>
    %167 = vector.extract_strided_slice %162 {offsets = [0, 3], sizes = [1, 3], strides = [1, 1]} : vector<1x6xf32> to vector<1x3xf32>
    %168 = arith.subf %132, %166 : vector<1x3xf32>
    %169 = arith.mulf %167, %168 : vector<1x3xf32>
    %170 = arith.addf %166, %169 : vector<1x3xf32>
    %c3 = arith.constant 3 : index
    %c0_25 = arith.constant 0 : index
    %171 = vector.load %arg4[%c3, %c0_25] : memref<128x3xf32, #tpu.memory_space<vmem>>, vector<1x3xf32>
    tpu.vector_store %arg4[%c3, %c0_25], %170 {strides = array<i32>} : memref<128x3xf32, #tpu.memory_space<vmem>>, vector<1x3xf32>,
    %172 = vector.extract_strided_slice %5 {offsets = [4, 0], sizes = [1, 6], strides = [1, 1]} : vector<8x6xf32> to vector<1x6xf32>
    %173 = vector.extract_strided_slice %10 {offsets = [4, 0], sizes = [1, 3], strides = [1, 1]} : vector<8x3xf32> to vector<1x3xf32>
    %174 = vector.extract_strided_slice %170 {offsets = [0, 0], sizes = [1, 1], strides = [1, 1]} : vector<1x3xf32> to vector<1x1xf32>
    %175 = vector.extract_strided_slice %170 {offsets = [0, 1], sizes = [1, 1], strides = [1, 1]} : vector<1x3xf32> to vector<1x1xf32>
    %176 = vector.extract_strided_slice %170 {offsets = [0, 2], sizes = [1, 1], strides = [1, 1]} : vector<1x3xf32> to vector<1x1xf32>
    %177 = vector.broadcast %174 : vector<1x1xf32> to vector<1x6xf32>
    %178 = arith.mulf %177, %13 : vector<1x6xf32>
    %179 = arith.addf %11, %178 : vector<1x6xf32>
    %180 = vector.broadcast %174 : vector<1x1xf32> to vector<1x3xf32>
    %181 = arith.mulf %180, %16 : vector<1x3xf32>
    %182 = arith.addf %12, %181 : vector<1x3xf32>
    %183 = vector.broadcast %175 : vector<1x1xf32> to vector<1x6xf32>
    %184 = arith.mulf %183, %14 : vector<1x6xf32>
    %185 = arith.addf %179, %184 : vector<1x6xf32>
    %186 = vector.broadcast %175 : vector<1x1xf32> to vector<1x3xf32>
    %187 = arith.mulf %186, %17 : vector<1x3xf32>
    %188 = arith.addf %182, %187 : vector<1x3xf32>
    %189 = vector.broadcast %176 : vector<1x1xf32> to vector<1x6xf32>
    %190 = arith.mulf %189, %15 : vector<1x6xf32>
    %191 = arith.addf %185, %190 : vector<1x6xf32>
    %192 = vector.broadcast %176 : vector<1x1xf32> to vector<1x3xf32>
    %193 = arith.mulf %192, %18 : vector<1x3xf32>
    %194 = arith.addf %188, %193 : vector<1x3xf32>
    %195 = arith.addf %172, %191 : vector<1x6xf32>
    %196 = arith.negf %195 : vector<1x6xf32>
    %197 = math.exp %196 : vector<1x6xf32>
    %cst_26 = arith.constant 1.000000e+00 : f32
    %198 = vector.broadcast %cst_26 : f32 to vector<1x6xf32>
    %199 = arith.addf %198, %197 : vector<1x6xf32>
    %200 = arith.divf %198, %199 : vector<1x6xf32>
    %201 = vector.extract_strided_slice %200 {offsets = [0, 0], sizes = [1, 3], strides = [1, 1]} : vector<1x6xf32> to vector<1x3xf32>
    %202 = arith.mulf %201, %194 : vector<1x3xf32>
    %203 = arith.addf %173, %202 : vector<1x3xf32>
    %204 = math.tanh %203 : vector<1x3xf32>
    %205 = vector.extract_strided_slice %200 {offsets = [0, 3], sizes = [1, 3], strides = [1, 1]} : vector<1x6xf32> to vector<1x3xf32>
    %206 = arith.subf %170, %204 : vector<1x3xf32>
    %207 = arith.mulf %205, %206 : vector<1x3xf32>
    %208 = arith.addf %204, %207 : vector<1x3xf32>
    %c4 = arith.constant 4 : index
    %c0_27 = arith.constant 0 : index
    %209 = vector.load %arg4[%c4, %c0_27] : memref<128x3xf32, #tpu.memory_space<vmem>>, vector<1x3xf32>
    tpu.vector_store %arg4[%c4, %c0_27], %208 {strides = array<i32>} : memref<128x3xf32, #tpu.memory_space<vmem>>, vector<1x3xf32>,
    %210 = vector.extract_strided_slice %5 {offsets = [5, 0], sizes = [1, 6], strides = [1, 1]} : vector<8x6xf32> to vector<1x6xf32>
    %211 = vector.extract_strided_slice %10 {offsets = [5, 0], sizes = [1, 3], strides = [1, 1]} : vector<8x3xf32> to vector<1x3xf32>
    %212 = vector.extract_strided_slice %208 {offsets = [0, 0], sizes = [1, 1], strides = [1, 1]} : vector<1x3xf32> to vector<1x1xf32>
    %213 = vector.extract_strided_slice %208 {offsets = [0, 1], sizes = [1, 1], strides = [1, 1]} : vector<1x3xf32> to vector<1x1xf32>
    %214 = vector.extract_strided_slice %208 {offsets = [0, 2], sizes = [1, 1], strides = [1, 1]} : vector<1x3xf32> to vector<1x1xf32>
    %215 = vector.broadcast %212 : vector<1x1xf32> to vector<1x6xf32>
    %216 = arith.mulf %215, %13 : vector<1x6xf32>
    %217 = arith.addf %11, %216 : vector<1x6xf32>
    %218 = vector.broadcast %212 : vector<1x1xf32> to vector<1x3xf32>
    %219 = arith.mulf %218, %16 : vector<1x3xf32>
    %220 = arith.addf %12, %219 : vector<1x3xf32>
    %221 = vector.broadcast %213 : vector<1x1xf32> to vector<1x6xf32>
    %222 = arith.mulf %221, %14 : vector<1x6xf32>
    %223 = arith.addf %217, %222 : vector<1x6xf32>
    %224 = vector.broadcast %213 : vector<1x1xf32> to vector<1x3xf32>
    %225 = arith.mulf %224, %17 : vector<1x3xf32>
    %226 = arith.addf %220, %225 : vector<1x3xf32>
    %227 = vector.broadcast %214 : vector<1x1xf32> to vector<1x6xf32>
    %228 = arith.mulf %227, %15 : vector<1x6xf32>
    %229 = arith.addf %223, %228 : vector<1x6xf32>
    %230 = vector.broadcast %214 : vector<1x1xf32> to vector<1x3xf32>
    %231 = arith.mulf %230, %18 : vector<1x3xf32>
    %232 = arith.addf %226, %231 : vector<1x3xf32>
    %233 = arith.addf %210, %229 : vector<1x6xf32>
    %234 = arith.negf %233 : vector<1x6xf32>
    %235 = math.exp %234 : vector<1x6xf32>
    %cst_28 = arith.constant 1.000000e+00 : f32
    %236 = vector.broadcast %cst_28 : f32 to vector<1x6xf32>
    %237 = arith.addf %236, %235 : vector<1x6xf32>
    %238 = arith.divf %236, %237 : vector<1x6xf32>
    %239 = vector.extract_strided_slice %238 {offsets = [0, 0], sizes = [1, 3], strides = [1, 1]} : vector<1x6xf32> to vector<1x3xf32>
    %240 = arith.mulf %239, %232 : vector<1x3xf32>
    %241 = arith.addf %211, %240 : vector<1x3xf32>
    %242 = math.tanh %241 : vector<1x3xf32>
    %243 = vector.extract_strided_slice %238 {offsets = [0, 3], sizes = [1, 3], strides = [1, 1]} : vector<1x6xf32> to vector<1x3xf32>
    %244 = arith.subf %208, %242 : vector<1x3xf32>
    %245 = arith.mulf %243, %244 : vector<1x3xf32>
    %246 = arith.addf %242, %245 : vector<1x3xf32>
    %c5 = arith.constant 5 : index
    %c0_29 = arith.constant 0 : index
    %247 = vector.load %arg4[%c5, %c0_29] : memref<128x3xf32, #tpu.memory_space<vmem>>, vector<1x3xf32>
    tpu.vector_store %arg4[%c5, %c0_29], %246 {strides = array<i32>} : memref<128x3xf32, #tpu.memory_space<vmem>>, vector<1x3xf32>,
    %248 = vector.extract_strided_slice %5 {offsets = [6, 0], sizes = [1, 6], strides = [1, 1]} : vector<8x6xf32> to vector<1x6xf32>
    %249 = vector.extract_strided_slice %10 {offsets = [6, 0], sizes = [1, 3], strides = [1, 1]} : vector<8x3xf32> to vector<1x3xf32>
    %250 = vector.extract_strided_slice %246 {offsets = [0, 0], sizes = [1, 1], strides = [1, 1]} : vector<1x3xf32> to vector<1x1xf32>
    %251 = vector.extract_strided_slice %246 {offsets = [0, 1], sizes = [1, 1], strides = [1, 1]} : vector<1x3xf32> to vector<1x1xf32>
    %252 = vector.extract_strided_slice %246 {offsets = [0, 2], sizes = [1, 1], strides = [1, 1]} : vector<1x3xf32> to vector<1x1xf32>
    %253 = vector.broadcast %250 : vector<1x1xf32> to vector<1x6xf32>
    %254 = arith.mulf %253, %13 : vector<1x6xf32>
    %255 = arith.addf %11, %254 : vector<1x6xf32>
    %256 = vector.broadcast %250 : vector<1x1xf32> to vector<1x3xf32>
    %257 = arith.mulf %256, %16 : vector<1x3xf32>
    %258 = arith.addf %12, %257 : vector<1x3xf32>
    %259 = vector.broadcast %251 : vector<1x1xf32> to vector<1x6xf32>
    %260 = arith.mulf %259, %14 : vector<1x6xf32>
    %261 = arith.addf %255, %260 : vector<1x6xf32>
    %262 = vector.broadcast %251 : vector<1x1xf32> to vector<1x3xf32>
    %263 = arith.mulf %262, %17 : vector<1x3xf32>
    %264 = arith.addf %258, %263 : vector<1x3xf32>
    %265 = vector.broadcast %252 : vector<1x1xf32> to vector<1x6xf32>
    %266 = arith.mulf %265, %15 : vector<1x6xf32>
    %267 = arith.addf %261, %266 : vector<1x6xf32>
    %268 = vector.broadcast %252 : vector<1x1xf32> to vector<1x3xf32>
    %269 = arith.mulf %268, %18 : vector<1x3xf32>
    %270 = arith.addf %264, %269 : vector<1x3xf32>
    %271 = arith.addf %248, %267 : vector<1x6xf32>
    %272 = arith.negf %271 : vector<1x6xf32>
    %273 = math.exp %272 : vector<1x6xf32>
    %cst_30 = arith.constant 1.000000e+00 : f32
    %274 = vector.broadcast %cst_30 : f32 to vector<1x6xf32>
    %275 = arith.addf %274, %273 : vector<1x6xf32>
    %276 = arith.divf %274, %275 : vector<1x6xf32>
    %277 = vector.extract_strided_slice %276 {offsets = [0, 0], sizes = [1, 3], strides = [1, 1]} : vector<1x6xf32> to vector<1x3xf32>
    %278 = arith.mulf %277, %270 : vector<1x3xf32>
    %279 = arith.addf %249, %278 : vector<1x3xf32>
    %280 = math.tanh %279 : vector<1x3xf32>
    %281 = vector.extract_strided_slice %276 {offsets = [0, 3], sizes = [1, 3], strides = [1, 1]} : vector<1x6xf32> to vector<1x3xf32>
    %282 = arith.subf %246, %280 : vector<1x3xf32>
    %283 = arith.mulf %281, %282 : vector<1x3xf32>
    %284 = arith.addf %280, %283 : vector<1x3xf32>
    %c6 = arith.constant 6 : index
    %c0_31 = arith.constant 0 : index
    %285 = vector.load %arg4[%c6, %c0_31] : memref<128x3xf32, #tpu.memory_space<vmem>>, vector<1x3xf32>
    tpu.vector_store %arg4[%c6, %c0_31], %284 {strides = array<i32>} : memref<128x3xf32, #tpu.memory_space<vmem>>, vector<1x3xf32>,
    %286 = vector.extract_strided_slice %5 {offsets = [7, 0], sizes = [1, 6], strides = [1, 1]} : vector<8x6xf32> to vector<1x6xf32>
    %287 = vector.extract_strided_slice %10 {offsets = [7, 0], sizes = [1, 3], strides = [1, 1]} : vector<8x3xf32> to vector<1x3xf32>
    %288 = vector.extract_strided_slice %284 {offsets = [0, 0], sizes = [1, 1], strides = [1, 1]} : vector<1x3xf32> to vector<1x1xf32>
    %289 = vector.extract_strided_slice %284 {offsets = [0, 1], sizes = [1, 1], strides = [1, 1]} : vector<1x3xf32> to vector<1x1xf32>
    %290 = vector.extract_strided_slice %284 {offsets = [0, 2], sizes = [1, 1], strides = [1, 1]} : vector<1x3xf32> to vector<1x1xf32>
    %291 = vector.broadcast %288 : vector<1x1xf32> to vector<1x6xf32>
    %292 = arith.mulf %291, %13 : vector<1x6xf32>
    %293 = arith.addf %11, %292 : vector<1x6xf32>
    %294 = vector.broadcast %288 : vector<1x1xf32> to vector<1x3xf32>
    %295 = arith.mulf %294, %16 : vector<1x3xf32>
    %296 = arith.addf %12, %295 : vector<1x3xf32>
    %297 = vector.broadcast %289 : vector<1x1xf32> to vector<1x6xf32>
    %298 = arith.mulf %297, %14 : vector<1x6xf32>
    %299 = arith.addf %293, %298 : vector<1x6xf32>
    %300 = vector.broadcast %289 : vector<1x1xf32> to vector<1x3xf32>
    %301 = arith.mulf %300, %17 : vector<1x3xf32>
    %302 = arith.addf %296, %301 : vector<1x3xf32>
    %303 = vector.broadcast %290 : vector<1x1xf32> to vector<1x6xf32>
    %304 = arith.mulf %303, %15 : vector<1x6xf32>
    %305 = arith.addf %299, %304 : vector<1x6xf32>
    %306 = vector.broadcast %290 : vector<1x1xf32> to vector<1x3xf32>
    %307 = arith.mulf %306, %18 : vector<1x3xf32>
    %308 = arith.addf %302, %307 : vector<1x3xf32>
    %309 = arith.addf %286, %305 : vector<1x6xf32>
    %310 = arith.negf %309 : vector<1x6xf32>
    %311 = math.exp %310 : vector<1x6xf32>
    %cst_32 = arith.constant 1.000000e+00 : f32
    %312 = vector.broadcast %cst_32 : f32 to vector<1x6xf32>
    %313 = arith.addf %312, %311 : vector<1x6xf32>
    %314 = arith.divf %312, %313 : vector<1x6xf32>
    %315 = vector.extract_strided_slice %314 {offsets = [0, 0], sizes = [1, 3], strides = [1, 1]} : vector<1x6xf32> to vector<1x3xf32>
    %316 = arith.mulf %315, %308 : vector<1x3xf32>
    %317 = arith.addf %287, %316 : vector<1x3xf32>
    %318 = math.tanh %317 : vector<1x3xf32>
    %319 = vector.extract_strided_slice %314 {offsets = [0, 3], sizes = [1, 3], strides = [1, 1]} : vector<1x6xf32> to vector<1x3xf32>
    %320 = arith.subf %284, %318 : vector<1x3xf32>
    %321 = arith.mulf %319, %320 : vector<1x3xf32>
    %322 = arith.addf %318, %321 : vector<1x3xf32>
    %c7 = arith.constant 7 : index
    %c0_33 = arith.constant 0 : index
    %323 = vector.load %arg4[%c7, %c0_33] : memref<128x3xf32, #tpu.memory_space<vmem>>, vector<1x3xf32>
    tpu.vector_store %arg4[%c7, %c0_33], %322 {strides = array<i32>} : memref<128x3xf32, #tpu.memory_space<vmem>>, vector<1x3xf32>,
    %c0_34 = arith.constant 0 : index
    %c0_35 = arith.constant 0 : index
    %324 = vector.load %arg4[%c0_34, %c0_35] : memref<128x3xf32, #tpu.memory_space<vmem>>, vector<128x3xf32>
    %c68 = arith.constant 68 : index
    %c0_36 = arith.constant 0 : index
    %325 = vector.load %arg2[%c68, %c0_36] : memref<72x6xf32, #tpu.memory_space<vmem>>, vector<1x3xf32>
    %c68_37 = arith.constant 68 : index
    %c3_38 = arith.constant 3 : index
    %326 = vector.load %arg2[%c68_37, %c3_38] : memref<72x6xf32, #tpu.memory_space<vmem>>, vector<1x1xf32>
    %cst_39 = arith.constant dense<0.000000e+00> : vector<1x128xf32>
    %327 = tpu.matmul %325, %324, %cst_39 {dimension_numbers = #tpu.dot_dimension_numbers<[1], [1], [0], [0], [0, 0, 1, 0], [], []>} : vector<1x3xf32>, vector<128x3xf32>, vector<1x128xf32> -> vector<1x128xf32>
    %328 = vector.broadcast %326 : vector<1x1xf32> to vector<1x128xf32>
    %329 = arith.addf %327, %328 : vector<1x128xf32>
    %330 = arith.negf %329 : vector<1x128xf32>
    %331 = math.exp %330 : vector<1x128xf32>
    %cst_40 = arith.constant 1.000000e+00 : f32
    %332 = vector.broadcast %cst_40 : f32 to vector<1x128xf32>
    %333 = arith.addf %332, %331 : vector<1x128xf32>
    %334 = arith.divf %332, %333 : vector<1x128xf32>
    %c0_41 = arith.constant 0 : index
    %c0_42 = arith.constant 0 : index
    %335 = vector.load %arg3[%c0_41, %c0_42] : memref<1x128xf32, #tpu.memory_space<vmem>>, vector<1x128xf32>
    tpu.vector_store %arg3[%c0_41, %c0_42], %334 {strides = array<i32>} : memref<1x128xf32, #tpu.memory_space<vmem>>, vector<1x128xf32>,
    return
  }
}

</mosaic_0001>

<llo_original>
// kernel: gru_forward.1
$region0: #{gru_forward.1}
  #allocation0 [shape = 'u32[]', space=smem, size = 0x4, offset = 0x4, fixed_abs, tag = 'smem constant byte address 0x4 - core index']
  #allocation1 [shape = 'u32[144,128]{1,0:T(1,128)}', space=vmem, size = 0x12000, scoped, tag = 'internal scratch']
  #allocation2 [shape = 'f32[128,3]{1,0:T(8,128)}', space=vmem, size = 0x10000, scoped, tag = 'scratch operand']
  %s0 = inlined_call_operand.vmem [shape: f32[8,21], index: 0, kind: input, shape index: {}]
  %s1 = inlined_call_operand.vmem [shape: f32[1,3], index: 1, kind: input, shape index: {}]
  %s2 = inlined_call_operand.vmem [shape: f32[72,6], index: 2, kind: input, shape index: {}]
  %s3 = inlined_call_operand.vmem [shape: f32[1,128], index: 3, kind: output, shape index: {}]
  %s4 = sld [smem:[#allocation0]]
  $region22: #{gru_forward.1} parent=0
    _
  %s6 = ssub.s32 1, %s4
  %s7 = scalar_select 0, %s6, %s4
  // Predicated region
  $region2: #{gru_forward.1} parent=0 // pred_check
    _
  $region3: #{gru_forward.1} parent=0 // pred_check_branch
    %9 = sbr.rel (0) target = $region5
  $region4: #{gru_forward.1} parent=0 // pred_region
    _
  $region5: #{gru_forward.1} parent=0 // pred_fallthru
    _
  // Predicated region
  $region6: #{gru_forward.1} parent=0 // pred_check
    _
  $region7: #{gru_forward.1} parent=0 // pred_check_branch
    %11 = sbr.rel (0) target = $region9
  $region8: #{gru_forward.1} parent=0 // pred_region
    _
  $region9: #{gru_forward.1} parent=0 // pred_fallthru
    _
  // Predicated region
  $region10: #{gru_forward.1} parent=0 // pred_check
    _
  $region11: #{gru_forward.1} parent=0 // pred_check_branch
    %13 = sbr.rel (0) target = $region13
  $region12: #{gru_forward.1} parent=0 // pred_region
    _
  $region13: #{gru_forward.1} parent=0 // pred_fallthru
    _
  %v14 = vld [vmem:[%s0] sm:$0xff]
  %v15 = vld [vmem:[%s2] sm:$0xff]
  %v16 = vld [vmem:[%s2 + $0x8] sm:$0xff]
  %v17 = vld [vmem:[%s2 + $0x10] sm:$0x1f]
  %v18 = vld [vmem:[%s2 + $0x40] sm:$0x1]
  %v19 = vlaneseq
  %v20 = vshrl.u32 %v19, 7
  %v21 = vsub.s32 0, %v20
  %v22 = vrot.slane %v18, %v21
  %vm23 = vcmask 171008
  %v25 = vsel %vm23, %v14, 0
  %vm27 = vcmask 1044480
  %v29 = vsel %vm27, %v17, 0
  %31 = vmatprep.subr.mxu0 0.0
  %32 = vmatpush1.msra.mxu0 %v15
  %33 = vmatprep.subr.mxu0 0.0
  %34 = vmatpush1.msra.mxu0 %v16
  %35 = vmatprep.subr.mxu0 0.0
  %36 = vmatpush1.msra.mxu0 %v29
  %37 = vmatprep.subr.mxu0 0.0
  %38 = vmatpush1.msra.mxu0 0.0
  %39 = vmatprep.subr.mxu0 0.0
  %40 = vmatpush1.msra.mxu0 0.0
  %41 = vmatprep.subr.mxu0 0.0
  %42 = vmatpush1.msra.mxu0 0.0
  %43 = vmatprep.subr.mxu0 0.0
  %44 = vmatpush1.msra.mxu0 0.0
  %45 = vmatprep.subr.mxu0 0.0
  %46 = vmatpush1.msra.mxu0 0.0
  %47 = vmatprep.subr.mxu0 0.0
  %48 = vmatpush1.msra.mxu0 0.0
  %49 = vmatprep.subr.mxu0 0.0
  %50 = vmatpush1.msra.mxu0 0.0
  %51 = vmatprep.subr.mxu0 0.0
  %52 = vmatpush1.msra.mxu0 0.0
  %53 = vmatprep.subr.mxu0 0.0
  %54 = vmatpush1.msra.mxu0 0.0
  %55 = vmatprep.subr.mxu0 0.0
  %56 = vmatpush1.msra.mxu0 0.0
  %57 = vmatprep.subr.mxu0 0.0
  %58 = vmatpush1.msra.mxu0 0.0
  %59 = vmatprep.subr.mxu0 0.0
  %60 = vmatpush1.msra.mxu0 0.0
  %61 = vmatprep.subr.mxu0 0.0
  %62 = vmatpush1.msra.mxu0 0.0
  %63 = vmatprep.subr.mxu0 0.0
  %64 = vmatpush1.msra.mxu0 0.0
  %65 = vmatprep.subr.mxu0 0.0
  %66 = vmatpush1.msra.mxu0 0.0
  %67 = vmatprep.subr.mxu0 0.0
  %68 = vmatpush1.msra.mxu0 0.0
  %69 = vmatprep.subr.mxu0 0.0
  %70 = vmatpush1.msra.mxu0 0.0
  %71 = vmatprep.subr.mxu0 0.0
  %72 = vmatpush1.msra.mxu0 0.0
  %73 = vmatprep.subr.mxu0 0.0
  %74 = vmatpush1.msra.mxu0 0.0
  %75 = vmatprep.subr.mxu0 0.0
  %76 = vmatpush1.msra.mxu0 0.0
  %77 = vmatprep.subr.mxu0 0.0
  %78 = vmatpush1.msra.mxu0 0.0
  %79 = vmatprep.subr.mxu0 0.0
  %80 = vmatpush1.msra.mxu0 0.0
  %81 = vmatprep.subr.mxu0 0.0
  %82 = vmatpush1.msra.mxu0 0.0
  %83 = vmatprep.subr.mxu0 0.0
  %84 = vmatpush1.msra.mxu0 0.0
  %85 = vmatprep.subr.mxu0 0.0
  %86 = vmatpush1.msra.mxu0 0.0
  %87 = vmatprep.subr.mxu0 0.0
  %88 = vmatpush1.msra.mxu0 0.0
  %89 = vmatprep.subr.mxu0 0.0
  %90 = vmatpush1.msra.mxu0 0.0
  %91 = vmatprep.subr.mxu0 0.0
  %92 = vmatpush1.msra.mxu0 0.0
  %93 = vmatprep.subr.mxu0 0.0
  %94 = vmatpush1.msra.mxu0 0.0
  %95 = vmatprep.mubr.f32.mxu0 0.0
  %96 = vmatmul.mubr.f32.gmra.mrb[0].mxu0 %v25
  %v97 = vpop.f32.mrb[0].mxu0
  %v98 = vadd.f32 %v22, %v97
  %v99 = vpop.f32.mrb[0].mxu0
  %100 = vdwg.mxu0
  %v101 = vld [vmem:[%s2 + $0x18] sm:$0xff]
  %v102 = vld [vmem:[%s2 + $0x20] sm:$0xff]
  %v103 = vld [vmem:[%s2 + $0x28] sm:$0x1f]
  %v104 = vld [vmem:[%s2 + $0x41] sm:$0x1]
  %v105 = vlaneseq
  %v106 = vshrl.u32 %v105, 7
  %v107 = vsub.s32 0, %v106
  %v108 = vrot.slane %v104, %v107
  %v110 = vsel %vm27, %v103, 0
  %112 = vmatprep.subr.mxu0 0.0
  %113 = vmatpush1.msra.mxu0 %v101
  %114 = vmatprep.subr.mxu0 0.0
  %115 = vmatpush1.msra.mxu0 %v102
  %116 = vmatprep.subr.mxu0 0.0
  %117 = vmatpush1.msra.mxu0 %v110
  %118 = vmatprep.subr.mxu0 0.0
  %119 = vmatpush1.msra.mxu0 0.0
  %120 = vmatprep.subr.mxu0 0.0
  %121 = vmatpush1.msra.mxu0 0.0
  %122 = vmatprep.subr.mxu0 0.0
  %123 = vmatpush1.msra.mxu0 0.0
  %124 = vmatprep.subr.mxu0 0.0
  %125 = vmatpush1.msra.mxu0 0.0
  %126 = vmatprep.subr.mxu0 0.0
  %127 = vmatpush1.msra.mxu0 0.0
  %128 = vmatprep.subr.mxu0 0.0
  %129 = vmatpush1.msra.mxu0 0.0
  %130 = vmatprep.subr.mxu0 0.0
  %131 = vmatpush1.msra.mxu0 0.0
  %132 = vmatprep.subr.mxu0 0.0
  %133 = vmatpush1.msra.mxu0 0.0
  %134 = vmatprep.subr.mxu0 0.0
  %135 = vmatpush1.msra.mxu0 0.0
  %136 = vmatprep.subr.mxu0 0.0
  %137 = vmatpush1.msra.mxu0 0.0
  %138 = vmatprep.subr.mxu0 0.0
  %139 = vmatpush1.msra.mxu0 0.0
  %140 = vmatprep.subr.mxu0 0.0
  %141 = vmatpush1.msra.mxu0 0.0
  %142 = vmatprep.subr.mxu0 0.0
  %143 = vmatpush1.msra.mxu0 0.0
  %144 = vmatprep.subr.mxu0 0.0
  %145 = vmatpush1.msra.mxu0 0.0
  %146 = vmatprep.subr.mxu0 0.0
  %147 = vmatpush1.msra.mxu0 0.0
  %148 = vmatprep.subr.mxu0 0.0
  %149 = vmatpush1.msra.mxu0 0.0
  %150 = vmatprep.subr.mxu0 0.0
  %151 = vmatpush1.msra.mxu0 0.0
  %152 = vmatprep.subr.mxu0 0.0
  %153 = vmatpush1.msra.mxu0 0.0
  %154 = vmatprep.subr.mxu0 0.0
  %155 = vmatpush1.msra.mxu0 0.0
  %156 = vmatprep.subr.mxu0 0.0
  %157 = vmatpush1.msra.mxu0 0.0
  %158 = vmatprep.subr.mxu0 0.0
  %159 = vmatpush1.msra.mxu0 0.0
  %160 = vmatprep.subr.mxu0 0.0
  %161 = vmatpush1.msra.mxu0 0.0
  %162 = vmatprep.subr.mxu0 0.0
  %163 = vmatpush1.msra.mxu0 0.0
  %164 = vmatprep.subr.mxu0 0.0
  %165 = vmatpush1.msra.mxu0 0.0
  %166 = vmatprep.subr.mxu0 0.0
  %167 = vmatpush1.msra.mxu0 0.0
  %168 = vmatprep.subr.mxu0 0.0
  %169 = vmatpush1.msra.mxu0 0.0
  %170 = vmatprep.subr.mxu0 0.0
  %171 = vmatpush1.msra.mxu0 0.0
  %172 = vmatprep.subr.mxu0 0.0
  %173 = vmatpush1.msra.mxu0 0.0
  %174 = vmatprep.subr.mxu0 0.0
  %175 = vmatpush1.msra.mxu0 0.0
  %176 = vmatprep.mubr.f32.mxu0 0.0
  %177 = vmatmul.mubr.f32.gmra.mrb[0].mxu0 %v25
  %v178 = vpop.f32.mrb[0].mxu0
  %v179 = vadd.f32 %v108, %v178
  %v180 = vpop.f32.mrb[0].mxu0
  %181 = vdwg.mxu0
  %v182 = vld [vmem:[%s2 + $0x42] sm:$0x1]
  %v183 = vld [vmem:[%s2 + $0x43] sm:$0x1]
  %v184 = vld [vmem:[%s2 + $0x30] sm:$0x1]
  %v185 = vld [vmem:[%s2 + $0x31] sm:$0x1]
  %v186 = vld [vmem:[%s2 + $0x32] sm:$0x1]
  %v187 = vld [vmem:[%s2 + $0x38] sm:$0x1]
  %v188 = vld [vmem:[%s2 + $0x39] sm:$0x1]
  %v189 = vld [vmem:[%s2 + $0x3a] sm:$0x1]
  %v190 = vld [vmem:[%s1] sm:$0x1]
  %192 = vset.pattern.permute.xlu0 0
  %193 = vperm.xlu0 %192, %v190
  %v194 = vpop.permute.xlu0 %193
  %v196 = vlaneseq
  %v197 = vshrl.u32 %v196, 7
  %v198 = vsub.s32 0, %v197
  %v199 = vrot.slane %v194, %v198
  %v200 = vmul.f32 %v199, %v184
  %v201 = vadd.f32 %v182, %v200
  %v202 = vmul.f32 %v199, %v187
  %v203 = vadd.f32 %v183, %v202
  %204 = vset.pattern.permute.xlu0 1
  %205 = vperm.xlu0 %204, %v190
  %v206 = vpop.permute.xlu0 %205
  %v208 = vlaneseq
  %v209 = vshrl.u32 %v208, 7
  %v210 = vsub.s32 0, %v209
  %v211 = vrot.slane %v206, %v210
  %v212 = vmul.f32 %v211, %v185
  %v213 = vadd.f32 %v201, %v212
  %v214 = vmul.f32 %v211, %v188
  %v215 = vadd.f32 %v203, %v214
  %216 = vset.pattern.permute.xlu0 2
  %217 = vperm.xlu0 %216, %v190
  %v218 = vpop.permute.xlu0 %217
  %v220 = vlaneseq
  %v221 = vshrl.u32 %v220, 7
  %v222 = vsub.s32 0, %v221
  %v223 = vrot.slane %v218, %v222
  %v224 = vmul.f32 %v223, %v186
  %v225 = vadd.f32 %v213, %v224
  %v226 = vmul.f32 %v223, %v189
  %v227 = vadd.f32 %v215, %v226
  %v228 = vadd.f32 %v98, %v225
  %v229 = vxor.u32 %v228, 2147483648
  %v230 = vmul.f32 %v229, 1.442695
  %v231 = vpow.pop %v230
  %v232 = vadd.f32 %v231, 1.0
  %v233 = vrcp.pop %v232
  %v234 = vmul.f32 1.0, %v233
  %v235 = vmul.f32 %v234, %v227
  %v236 = vadd.f32 %v179, %v235
  %v237 = vtanh.pop %v236
  %v238 = vsub.f32 %v190, %v237
  %v240 = vlaneseq
  %v241 = vshrl.u32 %v240, 7
  %v242 = vsub.s32 0, %v241
  %v243 = vrot.slane %v238, %v242
  %244 = vrot.lane.b32.xlu0 %v243, 3
  %v245 = vpop.permute.xlu0 %244
  %v247 = vmul.f32 %v234, %v245
  %249 = vrot.lane.b32.xlu0 %v247, 125
  %v250 = vpop.permute.xlu0 %249
  %v252 = vadd.f32 %v237, %v250
  %vm253 = vcmask 16384
  %254 = vst.msk [vmem:[#allocation2] sm:$0x1] %vm253, %v252
  %256 = vset.pattern.permute.xlu0 0
  %257 = vperm.xlu0 %256, %v252
  %v258 = vpop.permute.xlu0 %257
  %v260 = vmul.f32 %v258, %v184
  %v261 = vadd.f32 %v182, %v260
  %v262 = vmul.f32 %v258, %v187
  %v263 = vadd.f32 %v183, %v262
  %264 = vset.pattern.permute.xlu0 1
  %265 = vperm.xlu0 %264, %v252
  %v266 = vpop.permute.xlu0 %265
  %v268 = vmul.f32 %v266, %v185
  %v269 = vadd.f32 %v261, %v268
  %v270 = vmul.f32 %v266, %v188
  %v271 = vadd.f32 %v263, %v270
  %272 = vset.pattern.permute.xlu0 2
  %273 = vperm.xlu0 %272, %v252
  %v274 = vpop.permute.xlu0 %273
  %v276 = vmul.f32 %v274, %v186
  %v277 = vadd.f32 %v269, %v276
  %v278 = vmul.f32 %v274, %v189
  %v279 = vadd.f32 %v271, %v278
  %v281 = vrot.slane %v277, 7
  %v283 = vadd.f32 %v98, %v281
  %v284 = vxor.u32 %v283, 2147483648
  %v285 = vmul.f32 %v284, 1.442695
  %v286 = vpow.pop %v285
  %v287 = vadd.f32 %v286, 1.0
  %v288 = vrcp.pop %v287
  %v289 = vmul.f32 1.0, %v288
  %v291 = vrot.slane %v279, 7
  %v293 = vmul.f32 %v289, %v291
  %v294 = vadd.f32 %v179, %v293
  %v295 = vtanh.pop %v294
  %v297 = vrot.slane %v295, 1
  %v299 = vsub.f32 %v252, %v297
  %v301 = vrot.slane %v299, 7
  %302 = vrot.lane.b32.xlu0 %v301, 3
  %v303 = vpop.permute.xlu0 %302
  %v305 = vmul.f32 %v289, %v303
  %307 = vrot.lane.b32.xlu0 %v305, 125
  %v308 = vpop.permute.xlu0 %307
  %v310 = vadd.f32 %v295, %v308
  %vm311 = vcmask 17409
  %312 = vst.msk [vmem:[#allocation2] sm:$0x2] %vm311, %v310
  %314 = vset.pattern.permute.xlu0 0
  %315 = vperm.xlu0 %314, %v310
  %v316 = vpop.permute.xlu0 %315
  %v319 = vrot.slane %v184, 7
  %v321 = vmul.f32 %v316, %v319
  %v323 = vrot.slane %v321, 1
  %v325 = vadd.f32 %v182, %v323
  %v327 = vrot.slane %v187, 7
  %v329 = vmul.f32 %v316, %v327
  %v331 = vrot.slane %v329, 1
  %v333 = vadd.f32 %v183, %v331
  %334 = vset.pattern.permute.xlu0 1
  %335 = vperm.xlu0 %334, %v310
  %v336 = vpop.permute.xlu0 %335
  %v339 = vrot.slane %v185, 7
  %v341 = vmul.f32 %v336, %v339
  %v343 = vrot.slane %v341, 1
  %v345 = vadd.f32 %v325, %v343
  %v347 = vrot.slane %v188, 7
  %v349 = vmul.f32 %v336, %v347
  %v351 = vrot.slane %v349, 1
  %v353 = vadd.f32 %v333, %v351
  %354 = vset.pattern.permute.xlu0 2
  %355 = vperm.xlu0 %354, %v310
  %v356 = vpop.permute.xlu0 %355
  %v359 = vrot.slane %v186, 7
  %v361 = vmul.f32 %v356, %v359
  %v363 = vrot.slane %v361, 1
  %v365 = vadd.f32 %v345, %v363
  %v367 = vrot.slane %v189, 7
  %v369 = vmul.f32 %v356, %v367
  %v371 = vrot.slane %v369, 1
  %v373 = vadd.f32 %v353, %v371
  %v375 = vrot.slane %v365, 6
  %v377 = vadd.f32 %v98, %v375
  %v378 = vxor.u32 %v377, 2147483648
  %v379 = vmul.f32 %v378, 1.442695
  %v380 = vpow.pop %v379
  %v381 = vadd.f32 %v380, 1.0
  %v382 = vrcp.pop %v381
  %v383 = vmul.f32 1.0, %v382
  %v385 = vrot.slane %v373, 6
  %v387 = vmul.f32 %v383, %v385
  %v388 = vadd.f32 %v179, %v387
  %v389 = vtanh.pop %v388
  %v391 = vrot.slane %v389, 1
  %v393 = vsub.f32 %v310, %v391
  %v395 = vrot.slane %v393, 7
  %396 = vrot.lane.b32.xlu0 %v395, 3
  %v397 = vpop.permute.xlu0 %396
  %v399 = vmul.f32 %v383, %v397
  %401 = vrot.lane.b32.xlu0 %v399, 125
  %v402 = vpop.permute.xlu0 %401
  %v404 = vadd.f32 %v389, %v402
  %vm405 = vcmask 18434
  %406 = vst.msk [vmem:[#allocation2] sm:$0x4] %vm405, %v404
  %408 = vset.pattern.permute.xlu0 0
  %409 = vperm.xlu0 %408, %v404
  %v410 = vpop.permute.xlu0 %409
  %v412 = vrot.slane %v184, 6
  %v414 = vmul.f32 %v410, %v412
  %v416 = vrot.slane %v414, 2
  %v418 = vadd.f32 %v182, %v416
  %v419 = vrot.slane %v187, 6
  %v421 = vmul.f32 %v410, %v419
  %v423 = vrot.slane %v421, 2
  %v425 = vadd.f32 %v183, %v423
  %426 = vset.pattern.permute.xlu0 1
  %427 = vperm.xlu0 %426, %v404
  %v428 = vpop.permute.xlu0 %427
  %v430 = vrot.slane %v185, 6
  %v432 = vmul.f32 %v428, %v430
  %v434 = vrot.slane %v432, 2
  %v436 = vadd.f32 %v418, %v434
  %v437 = vrot.slane %v188, 6
  %v439 = vmul.f32 %v428, %v437
  %v441 = vrot.slane %v439, 2
  %v443 = vadd.f32 %v425, %v441
  %444 = vset.pattern.permute.xlu0 2
  %445 = vperm.xlu0 %444, %v404
  %v446 = vpop.permute.xlu0 %445
  %v448 = vrot.slane %v186, 6
  %v450 = vmul.f32 %v446, %v448
  %v452 = vrot.slane %v450, 2
  %v454 = vadd.f32 %v436, %v452
  %v455 = vrot.slane %v189, 6
  %v457 = vmul.f32 %v446, %v455
  %v459 = vrot.slane %v457, 2
  %v461 = vadd.f32 %v443, %v459
  %v463 = vrot.slane %v454, 5
  %v465 = vadd.f32 %v98, %v463
  %v466 = vxor.u32 %v465, 2147483648
  %v467 = vmul.f32 %v466, 1.442695
  %v468 = vpow.pop %v467
  %v469 = vadd.f32 %v468, 1.0
  %v470 = vrcp.pop %v469
  %v471 = vmul.f32 1.0, %v470
  %v473 = vrot.slane %v461, 5
  %v475 = vmul.f32 %v471, %v473
  %v476 = vadd.f32 %v179, %v475
  %v477 = vtanh.pop %v476
  %v479 = vrot.slane %v477, 1
  %v481 = vsub.f32 %v404, %v479
  %v483 = vrot.slane %v481, 7
  %484 = vrot.lane.b32.xlu0 %v483, 3
  %v485 = vpop.permute.xlu0 %484
  %v487 = vmul.f32 %v471, %v485
  %489 = vrot.lane.b32.xlu0 %v487, 125
  %v490 = vpop.permute.xlu0 %489
  %v492 = vadd.f32 %v477, %v490
  %vm493 = vcmask 19459
  %494 = vst.msk [vmem:[#allocation2] sm:$0x8] %vm493, %v492
  %496 = vset.pattern.permute.xlu0 0
  %497 = vperm.xlu0 %496, %v492
  %v498 = vpop.permute.xlu0 %497
  %v500 = vrot.slane %v184, 5
  %v502 = vmul.f32 %v498, %v500
  %v504 = vrot.slane %v502, 3
  %v506 = vadd.f32 %v182, %v504
  %v507 = vrot.slane %v187, 5
  %v509 = vmul.f32 %v498, %v507
  %v511 = vrot.slane %v509, 3
  %v513 = vadd.f32 %v183, %v511
  %514 = vset.pattern.permute.xlu0 1
  %515 = vperm.xlu0 %514, %v492
  %v516 = vpop.permute.xlu0 %515
  %v518 = vrot.slane %v185, 5
  %v520 = vmul.f32 %v516, %v518
  %v522 = vrot.slane %v520, 3
  %v524 = vadd.f32 %v506, %v522
  %v525 = vrot.slane %v188, 5
  %v527 = vmul.f32 %v516, %v525
  %v529 = vrot.slane %v527, 3
  %v531 = vadd.f32 %v513, %v529
  %532 = vset.pattern.permute.xlu0 2
  %533 = vperm.xlu0 %532, %v492
  %v534 = vpop.permute.xlu0 %533
  %v536 = vrot.slane %v186, 5
  %v538 = vmul.f32 %v534, %v536
  %v540 = vrot.slane %v538, 3
  %v542 = vadd.f32 %v524, %v540
  %v543 = vrot.slane %v189, 5
  %v545 = vmul.f32 %v534, %v543
  %v547 = vrot.slane %v545, 3
  %v549 = vadd.f32 %v531, %v547
  %v551 = vrot.slane %v542, 4
  %v553 = vadd.f32 %v98, %v551
  %v554 = vxor.u32 %v553, 2147483648
  %v555 = vmul.f32 %v554, 1.442695
  %v556 = vpow.pop %v555
  %v557 = vadd.f32 %v556, 1.0
  %v558 = vrcp.pop %v557
  %v559 = vmul.f32 1.0, %v558
  %v561 = vrot.slane %v549, 4
  %v563 = vmul.f32 %v559, %v561
  %v564 = vadd.f32 %v179, %v563
  %v565 = vtanh.pop %v564
  %v567 = vrot.slane %v565, 1
  %v569 = vsub.f32 %v492, %v567
  %v571 = vrot.slane %v569, 7
  %572 = vrot.lane.b32.xlu0 %v571, 3
  %v573 = vpop.permute.xlu0 %572
  %v575 = vmul.f32 %v559, %v573
  %577 = vrot.lane.b32.xlu0 %v575, 125
  %v578 = vpop.permute.xlu0 %577
  %v580 = vadd.f32 %v565, %v578
  %vm581 = vcmask 20484
  %582 = vst.msk [vmem:[#allocation2] sm:$0x10] %vm581, %v580
  %584 = vset.pattern.permute.xlu0 0
  %585 = vperm.xlu0 %584, %v580
  %v586 = vpop.permute.xlu0 %585
  %v588 = vrot.slane %v184, 4
  %v590 = vmul.f32 %v586, %v588
  %v592 = vrot.slane %v590, 4
  %v594 = vadd.f32 %v182, %v592
  %v595 = vrot.slane %v187, 4
  %v597 = vmul.f32 %v586, %v595
  %v599 = vrot.slane %v597, 4
  %v601 = vadd.f32 %v183, %v599
  %602 = vset.pattern.permute.xlu0 1
  %603 = vperm.xlu0 %602, %v580
  %v604 = vpop.permute.xlu0 %603
  %v606 = vrot.slane %v185, 4
  %v608 = vmul.f32 %v604, %v606
  %v610 = vrot.slane %v608, 4
  %v612 = vadd.f32 %v594, %v610
  %v613 = vrot.slane %v188, 4
  %v615 = vmul.f32 %v604, %v613
  %v617 = vrot.slane %v615, 4
  %v619 = vadd.f32 %v601, %v617
  %620 = vset.pattern.permute.xlu0 2
  %621 = vperm.xlu0 %620, %v580
  %v622 = vpop.permute.xlu0 %621
  %v624 = vrot.slane %v186, 4
  %v626 = vmul.f32 %v622, %v624
  %v628 = vrot.slane %v626, 4
  %v630 = vadd.f32 %v612, %v628
  %v631 = vrot.slane %v189, 4
  %v633 = vmul.f32 %v622, %v631
  %v635 = vrot.slane %v633, 4
  %v637 = vadd.f32 %v619, %v635
  %v639 = vrot.slane %v630, 3
  %v641 = vadd.f32 %v98, %v639
  %v642 = vxor.u32 %v641, 2147483648
  %v643 = vmul.f32 %v642, 1.442695
  %v644 = vpow.pop %v643
  %v645 = vadd.f32 %v644, 1.0
  %v646 = vrcp.pop %v645
  %v647 = vmul.f32 1.0, %v646
  %v649 = vrot.slane %v637, 3
  %v651 = vmul.f32 %v647, %v649
  %v652 = vadd.f32 %v179, %v651
  %v653 = vtanh.pop %v652
  %v655 = vrot.slane %v653, 1
  %v657 = vsub.f32 %v580, %v655
  %v659 = vrot.slane %v657, 7
  %660 = vrot.lane.b32.xlu0 %v659, 3
  %v661 = vpop.permute.xlu0 %660
  %v663 = vmul.f32 %v647, %v661
  %665 = vrot.lane.b32.xlu0 %v663, 125
  %v666 = vpop.permute.xlu0 %665
  %v668 = vadd.f32 %v653, %v666
  %vm669 = vcmask 21509
  %670 = vst.msk [vmem:[#allocation2] sm:$0x20] %vm669, %v668
  %672 = vset.pattern.permute.xlu0 0
  %673 = vperm.xlu0 %672, %v668
  %v674 = vpop.permute.xlu0 %673
  %v676 = vrot.slane %v184, 3
  %v678 = vmul.f32 %v674, %v676
  %v680 = vrot.slane %v678, 5
  %v682 = vadd.f32 %v182, %v680
  %v683 = vrot.slane %v187, 3
  %v685 = vmul.f32 %v674, %v683
  %v687 = vrot.slane %v685, 5
  %v689 = vadd.f32 %v183, %v687
  %690 = vset.pattern.permute.xlu0 1
  %691 = vperm.xlu0 %690, %v668
  %v692 = vpop.permute.xlu0 %691
  %v694 = vrot.slane %v185, 3
  %v696 = vmul.f32 %v692, %v694
  %v698 = vrot.slane %v696, 5
  %v700 = vadd.f32 %v682, %v698
  %v701 = vrot.slane %v188, 3
  %v703 = vmul.f32 %v692, %v701
  %v705 = vrot.slane %v703, 5
  %v707 = vadd.f32 %v689, %v705
  %708 = vset.pattern.permute.xlu0 2
  %709 = vperm.xlu0 %708, %v668
  %v710 = vpop.permute.xlu0 %709
  %v712 = vrot.slane %v186, 3
  %v714 = vmul.f32 %v710, %v712
  %v716 = vrot.slane %v714, 5
  %v718 = vadd.f32 %v700, %v716
  %v719 = vrot.slane %v189, 3
  %v721 = vmul.f32 %v710, %v719
  %v723 = vrot.slane %v721, 5
  %v725 = vadd.f32 %v707, %v723
  %v727 = vrot.slane %v718, 2
  %v729 = vadd.f32 %v98, %v727
  %v730 = vxor.u32 %v729, 2147483648
  %v731 = vmul.f32 %v730, 1.442695
  %v732 = vpow.pop %v731
  %v733 = vadd.f32 %v732, 1.0
  %v734 = vrcp.pop %v733
  %v735 = vmul.f32 1.0, %v734
  %v737 = vrot.slane %v725, 2
  %v739 = vmul.f32 %v735, %v737
  %v740 = vadd.f32 %v179, %v739
  %v741 = vtanh.pop %v740
  %v743 = vrot.slane %v741, 1
  %v745 = vsub.f32 %v668, %v743
  %v747 = vrot.slane %v745, 7
  %748 = vrot.lane.b32.xlu0 %v747, 3
  %v749 = vpop.permute.xlu0 %748
  %v751 = vmul.f32 %v735, %v749
  %753 = vrot.lane.b32.xlu0 %v751, 125
  %v754 = vpop.permute.xlu0 %753
  %v756 = vadd.f32 %v741, %v754
  %vm757 = vcmask 22534
  %758 = vst.msk [vmem:[#allocation2] sm:$0x40] %vm757, %v756
  %760 = vset.pattern.permute.xlu0 0
  %761 = vperm.xlu0 %760, %v756
  %v762 = vpop.permute.xlu0 %761
  %v764 = vrot.slane %v184, 2
  %v766 = vmul.f32 %v762, %v764
  %v768 = vrot.slane %v766, 6
  %v770 = vadd.f32 %v182, %v768
  %v771 = vrot.slane %v187, 2
  %v773 = vmul.f32 %v762, %v771
  %v775 = vrot.slane %v773, 6
  %v777 = vadd.f32 %v183, %v775
  %778 = vset.pattern.permute.xlu0 1
  %779 = vperm.xlu0 %778, %v756
  %v780 = vpop.permute.xlu0 %779
  %v782 = vrot.slane %v185, 2
  %v784 = vmul.f32 %v780, %v782
  %v786 = vrot.slane %v784, 6
  %v788 = vadd.f32 %v770, %v786
  %v789 = vrot.slane %v188, 2
  %v791 = vmul.f32 %v780, %v789
  %v793 = vrot.slane %v791, 6
  %v795 = vadd.f32 %v777, %v793
  %796 = vset.pattern.permute.xlu0 2
  %797 = vperm.xlu0 %796, %v756
  %v798 = vpop.permute.xlu0 %797
  %v800 = vrot.slane %v186, 2
  %v802 = vmul.f32 %v798, %v800
  %v804 = vrot.slane %v802, 6
  %v806 = vadd.f32 %v788, %v804
  %v807 = vrot.slane %v189, 2
  %v809 = vmul.f32 %v798, %v807
  %v811 = vrot.slane %v809, 6
  %v813 = vadd.f32 %v795, %v811
  %v815 = vrot.slane %v806, 1
  %v817 = vadd.f32 %v98, %v815
  %v818 = vxor.u32 %v817, 2147483648
  %v819 = vmul.f32 %v818, 1.442695
  %v820 = vpow.pop %v819
  %v821 = vadd.f32 %v820, 1.0
  %v822 = vrcp.pop %v821
  %v823 = vmul.f32 1.0, %v822
  %v825 = vrot.slane %v813, 1
  %v827 = vmul.f32 %v823, %v825
  %v828 = vadd.f32 %v179, %v827
  %v829 = vtanh.pop %v828
  %v831 = vrot.slane %v829, 1
  %v833 = vsub.f32 %v756, %v831
  %v835 = vrot.slane %v833, 7
  %836 = vrot.lane.b32.xlu0 %v835, 3
  %v837 = vpop.permute.xlu0 %836
  %v839 = vmul.f32 %v823, %v837
  %841 = vrot.lane.b32.xlu0 %v839, 125
  %v842 = vpop.permute.xlu0 %841
  %v844 = vadd.f32 %v829, %v842
  %vm845 = vcmask 23559
  %846 = vst.msk [vmem:[#allocation2] sm:$0x80] %vm845, %v844
  %v847 = vld [vmem:[#allocation2] sm:$0xff]
  %v848 = vld [vmem:[#allocation2 + $0x8] sm:$0xff]
  %v849 = vld [vmem:[#allocation2 + $0x10] sm:$0xff]
  %v850 = vld [vmem:[#allocation2 + $0x18] sm:$0xff]
  %v851 = vld [vmem:[#allocation2 + $0x20] sm:$0xff]
  %v852 = vld [vmem:[#allocation2 + $0x28] sm:$0xff]
  %v853 = vld [vmem:[#allocation2 + $0x30] sm:$0xff]
  %v854 = vld [vmem:[#allocation2 + $0x38] sm:$0xff]
  %v855 = vld [vmem:[#allocation2 + $0x40] sm:$0xff]
  %v856 = vld [vmem:[#allocation2 + $0x48] sm:$0xff]
  %v857 = vld [vmem:[#allocation2 + $0x50] sm:$0xff]
  %v858 = vld [vmem:[#allocation2 + $0x58] sm:$0xff]
  %v859 = vld [vmem:[#allocation2 + $0x60] sm:$0xff]
  %v860 = vld [vmem:[#allocation2 + $0x68] sm:$0xff]
  %v861 = vld [vmem:[#allocation2 + $0x70] sm:$0xff]
  %v862 = vld [vmem:[#allocation2 + $0x78] sm:$0xff]
  %v863 = vld [vmem:[%s2 + $0x44] sm:$0x1]
  %865 = vset.pattern.permute.xlu0 3
  %866 = vperm.xlu0 %865, %v863
  %v867 = vpop.permute.xlu0 %866
  %vm869 = vcmask 23552
  %v870 = vsel %vm869, %v863, 0
  %v873 = vsel %vm869, %v847, 0
  %v876 = vsel %vm869, %v848, 0
  %v879 = vsel %vm869, %v849, 0
  %v882 = vsel %vm869, %v850, 0
  %v885 = vsel %vm869, %v851, 0
  %v888 = vsel %vm869, %v852, 0
  %v891 = vsel %vm869, %v853, 0
  %v894 = vsel %vm869, %v854, 0
  %v897 = vsel %vm869, %v855, 0
  %v900 = vsel %vm869, %v856, 0
  %v903 = vsel %vm869, %v857, 0
  %v906 = vsel %vm869, %v858, 0
  %v909 = vsel %vm869, %v859, 0
  %v912 = vsel %vm869, %v860, 0
  %v915 = vsel %vm869, %v861, 0
  %v918 = vsel %vm869, %v862, 0
  %920 = vmatprep.subr.mxu0 0.0
  %921 = vmatpush1.xpose.msra.mxu0 %v873
  %922 = vmatprep.subr.mxu0 0.0
  %923 = vmatpush1.xpose.msra.mxu0 %v876
  %924 = vmatprep.subr.mxu0 0.0
  %925 = vmatpush1.xpose.msra.mxu0 %v879
  %926 = vmatprep.subr.mxu0 0.0
  %927 = vmatpush1.xpose.msra.mxu0 %v882
  %928 = vmatprep.subr.mxu0 0.0
  %929 = vmatpush1.xpose.msra.mxu0 %v885
  %930 = vmatprep.subr.mxu0 0.0
  %931 = vmatpush1.xpose.msra.mxu0 %v888
  %932 = vmatprep.subr.mxu0 0.0
  %933 = vmatpush1.xpose.msra.mxu0 %v891
  %934 = vmatprep.subr.mxu0 0.0
  %935 = vmatpush1.xpose.msra.mxu0 %v894
  %936 = vmatprep.subr.mxu0 0.0
  %937 = vmatpush1.xpose.msra.mxu0 %v897
  %938 = vmatprep.subr.mxu0 0.0
  %939 = vmatpush1.xpose.msra.mxu0 %v900
  %940 = vmatprep.subr.mxu0 0.0
  %941 = vmatpush1.xpose.msra.mxu0 %v903
  %942 = vmatprep.subr.mxu0 0.0
  %943 = vmatpush1.xpose.msra.mxu0 %v906
  %944 = vmatprep.subr.mxu0 0.0
  %945 = vmatpush1.xpose.msra.mxu0 %v909
  %946 = vmatprep.subr.mxu0 0.0
  %947 = vmatpush1.xpose.msra.mxu0 %v912
  %948 = vmatprep.subr.mxu0 0.0
  %949 = vmatpush1.xpose.msra.mxu0 %v915
  %950 = vmatprep.subr.mxu0 0.0
  %951 = vmatpush1.xpose.msra.mxu0 %v918
  %952 = vmatprep.subr.mxu0 0.0
  %953 = vmatpush1.xpose.msra.mxu0 0.0
  %954 = vmatprep.subr.mxu0 0.0
  %955 = vmatpush1.xpose.msra.mxu0 0.0
  %956 = vmatprep.subr.mxu0 0.0
  %957 = vmatpush1.xpose.msra.mxu0 0.0
  %958 = vmatprep.subr.mxu0 0.0
  %959 = vmatpush1.xpose.msra.mxu0 0.0
  %960 = vmatprep.subr.mxu0 0.0
  %961 = vmatpush1.xpose.msra.mxu0 0.0
  %962 = vmatprep.subr.mxu0 0.0
  %963 = vmatpush1.xpose.msra.mxu0 0.0
  %964 = vmatprep.subr.mxu0 0.0
  %965 = vmatpush1.xpose.msra.mxu0 0.0
  %966 = vmatprep.subr.mxu0 0.0
  %967 = vmatpush1.xpose.msra.mxu0 0.0
  %968 = vmatprep.subr.mxu0 0.0
  %969 = vmatpush1.xpose.msra.mxu0 0.0
  %970 = vmatprep.subr.mxu0 0.0
  %971 = vmatpush1.xpose.msra.mxu0 0.0
  %972 = vmatprep.subr.mxu0 0.0
  %973 = vmatpush1.xpose.msra.mxu0 0.0
  %974 = vmatprep.subr.mxu0 0.0
  %975 = vmatpush1.xpose.msra.mxu0 0.0
  %976 = vmatprep.subr.mxu0 0.0
  %977 = vmatpush1.xpose.msra.mxu0 0.0
  %978 = vmatprep.subr.mxu0 0.0
  %979 = vmatpush1.xpose.msra.mxu0 0.0
  %980 = vmatprep.subr.mxu0 0.0
  %981 = vmatpush1.xpose.msra.mxu0 0.0
  %982 = vmatprep.subr.mxu0 0.0
  %983 = vmatpush1.xpose.msra.mxu0 0.0
  %984 = vmatprep.mubr.f32.mxu0 0.0
  %985 = vmatmul.mubr.f32.gmra.mrb[0].mxu0 %v870
  %v986 = vpop.f32.mrb[0].mxu0
  %v987 = vadd.f32 %v867, %v986
  %v988 = vpop.f32.mrb[0].mxu0
  %989 = vdwg.mxu0
  %v990 = vxor.u32 %v987, 2147483648
  %v991 = vmul.f32 %v990, 1.442695
  %v992 = vpow.pop %v991
  %v993 = vadd.f32 %v992, 1.0
  %v994 = vrcp.pop %v993
  %v995 = vmul.f32 1.0, %v994
  %996 = vst [vmem:[%s3] sm:$0x1] %v995
  // Predicated region
  $region14: #{gru_forward.1} parent=0 // pred_check
    _
  $region15: #{gru_forward.1} parent=0 // pred_check_branch
    %998 = sbr.rel (0) target = $region17
  $region16: #{gru_forward.1} parent=0 // pred_region
    _
  $region17: #{gru_forward.1} parent=0 // pred_fallthru
    _
  // Predicated region
  $region18: #{gru_forward.1} parent=0 // pred_check
    _
  $region19: #{gru_forward.1} parent=0 // pred_check_branch
    %1000 = sbr.rel (0) target = $region21
  $region20: #{gru_forward.1} parent=0 // pred_region
    _
  $region21: #{gru_forward.1} parent=0 // pred_fallthru
    _

</llo_original>
